<compile_context>
chip_gen: v5e
topology: v5e:2x2
jax: 0.10.0
libtpu: 0.0.40
codegen_flags: <defaults>
</compile_context>

<pallas_src>
import functools

import jax
import jax.numpy as jnp
from jax.experimental import pallas as pl
from jax.experimental.pallas import tpu as pltpu


def _vmem_limit_bytes():
    """min(3/4 of VMEM capacity, 64 MiB): ~48 MiB on v7x, 64 MiB on v5e/v6e."""
    cap = 64 * 1024 * 1024
    try:
        info = pltpu.get_tpu_info()
        cap_attr = getattr(info, "vmem_capacity_bytes", None)
        if cap_attr:
            cap = int(cap_attr)
    except Exception:
        pass
    return min((cap * 3) // 4, 64 * 1024 * 1024)


def _poly1_kernel(logits_ref, rowp_ref, out_ref, *,
                  epsilon, n_total, block_n, reduce_tile):
    """One batch tile: per-row poly1 loss (masked tail=0).

    reduce_tile=True  -> out_ref is a (1, 1, 1) per-tile partial sum.
    reduce_tile=False -> out_ref is the (TN, 1) per-row loss column.
    """
    i = pl.program_id(0)

    x = logits_ref[...].astype(jnp.float32)           # [TN, C] f32
    rp = rowp_ref[...]                                 # [TN, 3] f32
    x_t = rp[:, 0:1]                                   # logits[target]
    w_t = rp[:, 1:2]                                   # w[target]        (CE)
    wn_t = rp[:, 2:3]                                  # w[target]/mean(w) (p_t)
    tn = x.shape[0]

    # log-sum-exp over the class (lane) axis -- the only full-tile work.
    m = jnp.max(x, axis=-1, keepdims=True)             # [TN, 1]
    s = jnp.sum(jnp.exp(x - m), axis=-1, keepdims=True)

    logp_t = x_t - m - jnp.log(s)                      # log_softmax at target
    pt = jnp.exp(logp_t) * wn_t                        # weighted softmax prob
    poly1 = epsilon * (1.0 - pt) - w_t * logp_t        # CE + eps*(1-pt), [TN,1]

    # Zero out padded / ragged tail rows via select (keeps NaN from garbage
    # rows out of the sums -- do NOT replace with a multiply).
    row = jax.lax.broadcasted_iota(jnp.int32, (tn, 1), 0) + i * block_n
    masked = jnp.where(row < n_total, poly1, 0.0)

    if reduce_tile:
        tile_sum = jnp.sum(masked, axis=0, keepdims=True)   # (1, 1)
        out_ref[0] = tile_sum
    else:
        out_ref[...] = masked


def poly1_cross_entropy_loss(logits, target, *, epsilon=1.0, reduction="mean",
                             weight=None, block_n=None):
    """JAX/Pallas equivalent of Poly1CrossEntropyLoss.forward."""
    logits = jnp.asarray(logits)                       # keep native dtype (bf16 ok)
    if logits.ndim == 1:                               # input.unsqueeze(0)
        logits = logits[None, :]

    target = jnp.asarray(target)
    if target.ndim > 1:                                # hard-label path (argmax)
        target = jnp.argmax(target, axis=1)
    target = target.astype(jnp.int32)

    n, c = logits.shape
    if weight is None:
        w = jnp.ones((c,), jnp.float32)
    else:
        w = jnp.asarray(weight, jnp.float32).reshape(c)

    # Per-row gathers in XLA (touch only N elements) so the kernel keeps no
    # [TN, C] one-hot work: x_t, w_t, w_t/mean(w)  -> [N, 3] f32 side input.
    x_t = jnp.take_along_axis(logits, target[:, None], axis=1).astype(jnp.float32)
    w_t = jnp.take(w, target)[:, None].astype(jnp.float32)
    wn_t = w_t / jnp.mean(w)
    rowp = jnp.concatenate([x_t, w_t, wn_t], axis=1)   # [N, 3]

    # --- generation-aware tile sizing --------------------------------------
    itemsize = jnp.dtype(logits.dtype).itemsize
    pack = max(8, 32 // max(itemsize, 1))              # 8 f32 / 16 bf16 / 32 int8
    vmem_limit = _vmem_limit_bytes()

    # Estimated per-row VMEM bytes: double-buffered native logits tile,
    # ~2 f32 [TN, C] temps (upcast + exp), lane-padded rowp tile (x2 buffers).
    per_row = c * (2 * itemsize + 8) + 2 * 128 * 4
    if per_row * pack > vmem_limit:
        # TODO(synk): class-axis tiling (two-pass online softmax) for huge C.
        raise NotImplementedError(
            f"class axis C={c} too large for a single VMEM tile on this TPU")

    if block_n is None:
        budget = (vmem_limit * 3) // 4                 # leave headroom below limit
        block_n = min(8192, max(pack, budget // per_row))
    block_n = max(pack, (int(block_n) // pack) * pack)
    if block_n >= n:
        if n > pack:
            # Never collapse to a single grid step: split into >=2 balanced
            # tiles so ("parallel",) can shard across both v7x TensorCores.
            half = -(-n // 2)
            block_n = -(-half // pack) * pack
        else:
            block_n = n                                # tiny batch: one full tile
    grid = -(-n // block_n)

    reduce_tile = reduction in ("mean", "sum")
    kernel = functools.partial(_poly1_kernel, epsilon=float(epsilon),
                               n_total=n, block_n=block_n,
                               reduce_tile=reduce_tile)

    if reduce_tile:
        out_shape = jax.ShapeDtypeStruct((grid, 1, 1), jnp.float32)
        out_spec = pl.BlockSpec((1, 1, 1), lambda i: (i, 0, 0))
    else:
        n_pad = grid * block_n
        out_shape = jax.ShapeDtypeStruct((n_pad, 1), jnp.float32)
        out_spec = pl.BlockSpec((block_n, 1), lambda i: (i, 0))

    out = pl.pallas_call(
        kernel,
        out_shape=out_shape,
        grid_spec=pltpu.PrefetchScalarGridSpec(
            num_scalar_prefetch=0,
            grid=(grid,),
            in_specs=[
                pl.BlockSpec((block_n, c), lambda i: (i, 0)),   # logits (native dtype)
                pl.BlockSpec((block_n, 3), lambda i: (i, 0)),   # per-row params
            ],
            out_specs=out_spec,
        ),
        compiler_params=pltpu.CompilerParams(
            dimension_semantics=("parallel",),          # shards across TCs on v7x
            vmem_limit_bytes=int(vmem_limit),
        ),
    )(logits, rowp)

    if reduction == "mean":
        return jnp.sum(out) / jnp.float32(n)            # padded rows contribute 0
    if reduction == "sum":
        return jnp.sum(out)
    return out[:n, 0]                                    # 'none'


def _reference(logits, target, epsilon, reduction, weight):
    """Pure-JAX reference mirroring the torch module (hard labels)."""
    logits = jnp.asarray(logits, jnp.float32)
    if logits.ndim == 1:
        logits = logits[None, :]
    target = jnp.asarray(target)
    if target.ndim > 1:
        target = jnp.argmax(target, axis=1)
    n, c = logits.shape
    w = jnp.ones((c,), jnp.float32) if weight is None else jnp.asarray(
        weight, jnp.float32)
    probs = jax.nn.softmax(logits, axis=-1)
    probs_w = probs * w[None, :] / jnp.mean(w)
    pt = jnp.take_along_axis(probs_w, target[:, None], axis=-1)[:, 0]
    logp = jax.nn.log_softmax(logits, axis=-1)
    logp_t = jnp.take_along_axis(logp, target[:, None], axis=-1)[:, 0]
    ce = -w[target] * logp_t
    poly1 = ce + epsilon * (1.0 - pt)
    if reduction == "mean":
        return jnp.mean(poly1)
    if reduction == "sum":
        return jnp.sum(poly1)
    return poly1


if __name__ == "__main__":
    key = jax.random.PRNGKey(0)
    k1, k2 = jax.random.split(key)

    N, C = 16, 8
    logits_f32 = jax.random.normal(k1, (N, C), dtype=jnp.float32)
    logits_bf16 = logits_f32.astype(jnp.bfloat16)
    target = jax.random.randint(k2, (N,), 0, C, dtype=jnp.int32)
    target_2d = jax.nn.one_hot(target, C, dtype=jnp.float32)
    weight = jnp.linspace(0.5, 1.5, C, dtype=jnp.float32)

    cases = [
        ("mean", logits_f32, target, weight),
        ("sum", logits_f32, target, None),
        ("none", logits_f32, target, weight),
        ("mean", logits_bf16, target, weight),            # native bf16 streaming
        ("mean", logits_f32, target_2d, weight),          # 2-D target -> argmax
        ("mean", logits_f32[:13], target[:13], weight),   # ragged tail block
        ("none", logits_f32[:13], target[:13], None),     # ragged tail, per-row
    ]

    ok = True
    for reduction, lg, tg, w in cases:
        out = poly1_cross_entropy_loss(lg, tg, epsilon=1.0,
                                       reduction=reduction, weight=w)
        out = jax.block_until_ready(out)
        ref = _reference(lg, tg, 1.0, reduction, w)
        if not jnp.allclose(out, ref, atol=1e-4, rtol=1e-4):
            ok = False
            print(f"MISMATCH ({reduction}, {lg.dtype}, n={lg.shape[0]}): "
                  f"{out} vs {ref}")

    if ok:
        print("KERNEL_OK")
</pallas_src>

<mosaic_0001>
module attributes {stable_mosaic.version = 11 : i64} {
  func.func @_poly1_kernel(%arg0: i32, %arg1: memref<8x8xf32, #tpu.memory_space<vmem>>, %arg2: memref<8x3xf32, #tpu.memory_space<vmem>>, %arg3: memref<1x1x1xf32, #tpu.memory_space<vmem>>) attributes {dimension_semantics = [#tpu.dimension_semantics<parallel>], iteration_bounds = array<i64: 2>, scalar_prefetch = 0 : i64, scratch_operands = 0 : i64, tpu.core_type = #tpu.core_type<tc>, window_params = [{transform_indices = @transform_0, window_bounds = array<i64: 8, 8>}, {transform_indices = @transform_1, window_bounds = array<i64: 8, 3>}, {transform_indices = @transform_2, window_bounds = array<i64: 1, 1, 1>}]} {
    %c0 = arith.constant 0 : index
    %c0_0 = arith.constant 0 : index
    %0 = vector.load %arg1[%c0, %c0_0] : memref<8x8xf32, #tpu.memory_space<vmem>>, vector<8x8xf32>
    %c0_1 = arith.constant 0 : index
    %c0_2 = arith.constant 0 : index
    %1 = vector.load %arg2[%c0_1, %c0_2] : memref<8x3xf32, #tpu.memory_space<vmem>>, vector<8x3xf32>
    %2 = vector.extract_strided_slice %1 {offsets = [0, 0], sizes = [8, 1], strides = [1, 1]} : vector<8x3xf32> to vector<8x1xf32>
    %3 = vector.extract_strided_slice %1 {offsets = [0, 1], sizes = [8, 1], strides = [1, 1]} : vector<8x3xf32> to vector<8x1xf32>
    %4 = vector.extract_strided_slice %1 {offsets = [0, 2], sizes = [8, 1], strides = [1, 1]} : vector<8x3xf32> to vector<8x1xf32>
    %cst = arith.constant dense<0xFF800000> : vector<8xf32>
    %5 = vector.multi_reduction <maximumf>, %0, %cst [1] : vector<8x8xf32> to vector<8xf32>
    %6 = vector.shape_cast %5 : vector<8xf32> to vector<8x1xf32>
    %7 = vector.broadcast %6 : vector<8x1xf32> to vector<8x8xf32>
    %8 = arith.subf %0, %7 : vector<8x8xf32>
    %9 = math.exp %8 : vector<8x8xf32>
    %cst_3 = arith.constant dense<0.000000e+00> : vector<8xf32>
    %10 = vector.multi_reduction <add>, %9, %cst_3 [1] : vector<8x8xf32> to vector<8xf32>
    %11 = vector.shape_cast %10 : vector<8xf32> to vector<8x1xf32>
    %12 = arith.subf %2, %6 : vector<8x1xf32>
    %13 = math.log %11 : vector<8x1xf32>
    %14 = arith.subf %12, %13 : vector<8x1xf32>
    %15 = math.exp %14 : vector<8x1xf32>
    %16 = arith.mulf %15, %4 : vector<8x1xf32>
    %cst_4 = arith.constant 1.000000e+00 : f32
    %17 = vector.broadcast %cst_4 : f32 to vector<8x1xf32>
    %18 = arith.subf %17, %16 : vector<8x1xf32>
    %cst_5 = arith.constant 1.000000e+00 : f32
    %19 = vector.broadcast %cst_5 : f32 to vector<8x1xf32>
    %20 = arith.mulf %19, %18 : vector<8x1xf32>
    %21 = arith.mulf %3, %14 : vector<8x1xf32>
    %22 = arith.subf %20, %21 : vector<8x1xf32>
    %23 = tpu.iota {dimensions = array<i32: 0>} : vector<8x1xi32>
    %c8_i32 = arith.constant 8 : i32
    %24 = arith.muli %arg0, %c8_i32 : i32
    %25 = vector.broadcast %24 : i32 to vector<8x1xi32>
    %26 = arith.addi %23, %25 : vector<8x1xi32>
    %c16_i32 = arith.constant 16 : i32
    %27 = vector.broadcast %c16_i32 : i32 to vector<8x1xi32>
    %28 = arith.cmpi slt, %26, %27 : vector<8x1xi32>
    %cst_6 = arith.constant 0.000000e+00 : f32
    %29 = vector.broadcast %cst_6 : f32 to vector<8x1xf32>
    %30 = arith.select %28, %22, %29 : vector<8x1xi1>, vector<8x1xf32>
    %cst_7 = arith.constant dense<0.000000e+00> : vector<1xf32>
    %31 = vector.multi_reduction <add>, %30, %cst_7 [0] : vector<8x1xf32> to vector<1xf32>
    %32 = vector.shape_cast %31 : vector<1xf32> to vector<1x1xf32>
    %c0_8 = arith.constant 0 : index
    %c0_9 = arith.constant 0 : index
    %c0_10 = arith.constant 0 : index
    %33 = vector.load %arg3[%c0_8, %c0_9, %c0_10] : memref<1x1x1xf32, #tpu.memory_space<vmem>>, vector<1x1x1xf32>
    %34 = vector.shape_cast %33 : vector<1x1x1xf32> to vector<1x1xf32>
    %35 = vector.shape_cast %32 : vector<1x1xf32> to vector<1x1x1xf32>
    tpu.vector_store %arg3[%c0_8, %c0_9, %c0_10], %35 {strides = array<i32>} : memref<1x1x1xf32, #tpu.memory_space<vmem>>, vector<1x1x1xf32>,
    return
  }
  func.func @transform_0(%arg0: i32) -> (i32, i32) {
    %c0_i32 = arith.constant 0 : i32
    %c0_i32_0 = arith.constant 0 : i32
    return %arg0, %c0_i32 : i32, i32
  }
  func.func @transform_1(%arg0: i32) -> (i32, i32) {
    %c0_i32 = arith.constant 0 : i32
    %c0_i32_0 = arith.constant 0 : i32
    return %arg0, %c0_i32 : i32, i32
  }
  func.func @transform_2(%arg0: i32) -> (i32, i32, i32) {
    %c0_i32 = arith.constant 0 : i32
    %c0_i32_0 = arith.constant 0 : i32
    %c0_i32_1 = arith.constant 0 : i32
    return %arg0, %c0_i32, %c0_i32_0 : i32, i32, i32
  }
}

</mosaic_0001>

<llo_original>
// kernel: tpu_custom_call.1
$region0: #{tpu_custom_call.1}
  #allocation0 [shape = 'u32[]', space=smem, size = 0x4, offset = 0x4, fixed_abs, tag = 'smem constant byte address 0x4 - core index']
  #allocation1 [shape = 'u32[72,128]{1,0:T(1,128)}', space=vmem, size = 0x9000, scoped, tag = 'internal scratch']
  %s0 = inlined_call_operand.vmem [shape: f32[16,8], index: 0, kind: input, shape index: {}]
  %s1 = inlined_call_operand.vmem [shape: f32[16,3], index: 1, kind: input, shape index: {}]
  %s2 = inlined_call_operand.vmem [shape: f32[2,1,1], index: 2, kind: output, shape index: {}]
  %s3 = sld [smem:[#allocation0]]
  $region41: #{tpu_custom_call.1} parent=0
    _
  %s5 = ssub.s32 1, %s3
  %s6 = scalar_select 0, %s5, %s3
  loop: start=0, step=1, limit=4
  $region2: #{tpu_custom_call.1} parent=0 // loop_pre_header
    _
  $region3: #{tpu_custom_call.1} parent=0 // loop_header
    %s8 = sphi 0, %s12
    %p9 = scmp.ge.s32.totalorder %s8, 4
    %s18 = sphi 0, %s20
    %s21 = sphi 0, %s18
    %s22 = sphi 0, %s21
    %s38 = sphi 0, %s22
    %s44 = sphi 0, %s46
    %s47 = sphi 0, %s44
    %s48 = sphi 0, %s47
    %s64 = sphi 0, %s48
    %s70 = sphi 0, %s72
    %s73 = sphi 0, %s70
    %s74 = sphi 0, %s73
    %s90 = sphi 0, %s74
  $region4: #{tpu_custom_call.1} parent=0 // loop_header_branch
    %11 = sbr.rel (%p9) target = $region8
  $region5: #{tpu_custom_call.1} parent=0 // loop_body
    %s13 = ssub.s32 %s8, 1
    %s14 = ssub.s32 %s8, 2
    %s15 = sadd.s32 %s8, 1
    %s16 = ssub.s32 %s8, %s15
    %p17 = scmp.eq.s32.totalorder %s16, 0
    %s19 = sadd.s32 %s18, 1
    %s20 = scalar_select %p17, %s18, %s19
    %p23 = pneg %p17
    %p24 = scmp.eq.s32.totalorder %s8, 1
    %p25 = por %p23, %p24
    %p26 = scmp.ne.s32.totalorder %s18, %s21
    %p27 = scmp.eq.s32.totalorder %s8, 0
    %p28 = por %p26, %p27
    %p29 = scmp.ne.s32.totalorder %s18, %s21
    %p30 = scmp.eq.s32.totalorder %s13, 1
    %p31 = por %p29, %p30
    %p32 = scmp.ne.s32.totalorder %s21, %s22
    %p33 = scmp.eq.s32.totalorder %s13, 0
    %p34 = por %p32, %p33
    %p35 = scmp.ne.s32.totalorder %s21, %s22
    %p36 = scmp.eq.s32.totalorder %s14, 1
    %p37 = por %p35, %p36
    %p39 = scmp.ne.s32.totalorder %s22, %s38
    %p40 = scmp.eq.s32.totalorder %s14, 0
    %p41 = por %p39, %p40
    %s42 = ssub.s32 %s8, %s15
    %p43 = scmp.eq.s32.totalorder %s42, 0
    %s45 = sadd.s32 %s44, 1
    %s46 = scalar_select %p43, %s44, %s45
    %p49 = pneg %p43
    %p50 = scmp.eq.s32.totalorder %s8, 1
    %p51 = por %p49, %p50
    %p52 = scmp.ne.s32.totalorder %s44, %s47
    %p53 = scmp.eq.s32.totalorder %s8, 0
    %p54 = por %p52, %p53
    %p55 = scmp.ne.s32.totalorder %s44, %s47
    %p56 = scmp.eq.s32.totalorder %s13, 1
    %p57 = por %p55, %p56
    %p58 = scmp.ne.s32.totalorder %s47, %s48
    %p59 = scmp.eq.s32.totalorder %s13, 0
    %p60 = por %p58, %p59
    %p61 = scmp.ne.s32.totalorder %s47, %s48
    %p62 = scmp.eq.s32.totalorder %s14, 1
    %p63 = por %p61, %p62
    %p65 = scmp.ne.s32.totalorder %s48, %s64
    %p66 = scmp.eq.s32.totalorder %s14, 0
    %p67 = por %p65, %p66
    %s68 = ssub.s32 %s8, %s15
    %p69 = scmp.eq.s32.totalorder %s68, 0
    %s71 = sadd.s32 %s70, 1
    %s72 = scalar_select %p69, %s70, %s71
    %p75 = pneg %p69
    %p76 = scmp.eq.s32.totalorder %s8, 1
    %p77 = por %p75, %p76
    %p78 = scmp.ne.s32.totalorder %s70, %s73
    %p79 = scmp.eq.s32.totalorder %s8, 0
    %p80 = por %p78, %p79
    %p81 = scmp.ne.s32.totalorder %s70, %s73
    %p82 = scmp.eq.s32.totalorder %s13, 1
    %p83 = por %p81, %p82
    %p84 = scmp.ne.s32.totalorder %s73, %s74
    %p85 = scmp.eq.s32.totalorder %s13, 0
    %p86 = por %p84, %p85
    %p87 = scmp.ne.s32.totalorder %s73, %s74
    %p88 = scmp.eq.s32.totalorder %s14, 1
    %p89 = por %p87, %p88
    %p91 = scmp.ne.s32.totalorder %s74, %s90
    %p92 = scmp.eq.s32.totalorder %s14, 0
    %p93 = por %p91, %p92
    %p94 = scmp.le.s32.totalorder 1, %s8
    %p95 = scmp.lt.s32.totalorder %s8, 3
    %p96 = pnand %p94, %p95
    %p97 = pneg %p96
    // Predicated region
    $region9: #{tpu_custom_call.1} parent=5 // pred_check
      _
    $region10: #{tpu_custom_call.1} parent=5 // pred_check_branch
      %99 = sbr.rel (%p96) target = $region12
    $region11: #{tpu_custom_call.1} parent=5 // pred_region
      %s100 = ssub.s32 %s8, 1
    $region12: #{tpu_custom_call.1} parent=5 // pred_fallthru
      _
    %p101 = scmp.lt.s32.totalorder %s8, 2
    // Predicated region
    $region13: #{tpu_custom_call.1} parent=5 // pred_check
      %p102 = pneg %p101
    $region14: #{tpu_custom_call.1} parent=5 // pred_check_branch
      %104 = sbr.rel (%p102) target = $region16
    $region15: #{tpu_custom_call.1} parent=5 // pred_region
      // Predicated region
      $region17: #{tpu_custom_call.1} parent=15 // pred_check
        %p105 = pneg %p28
      $region18: #{tpu_custom_call.1} parent=15 // pred_check_branch
        %107 = sbr.rel (%p105) target = $region20
      $region19: #{tpu_custom_call.1} parent=15 // pred_region
        %p108 = scmp.lt.s32.totalorder %s8, 1
        %s109 = scalar_select %p108, %s8, 1
        %s110 = smul.addr %s109, 8
        %s111 = scalar_lea.vmem %s0, %s110
      $region20: #{tpu_custom_call.1} parent=15 // pred_fallthru
        _
      // Predicated region
      $region21: #{tpu_custom_call.1} parent=15 // pred_check
        %p112 = pneg %p54
      $region22: #{tpu_custom_call.1} parent=15 // pred_check_branch
        %114 = sbr.rel (%p112) target = $region24
      $region23: #{tpu_custom_call.1} parent=15 // pred_region
        %p115 = scmp.lt.s32.totalorder %s8, 1
        %s116 = scalar_select %p115, %s8, 1
        %s117 = smul.addr %s116, 8
        %s118 = scalar_lea.vmem %s1, %s117
      $region24: #{tpu_custom_call.1} parent=15 // pred_fallthru
        _
    $region16: #{tpu_custom_call.1} parent=5 // pred_fallthru
      _
    %p119 = scmp.le.s32.totalorder 1, %s8
    %p120 = scmp.lt.s32.totalorder %s8, 3
    %p121 = pnand %p119, %p120
    %p122 = pneg %p121
    // Predicated region
    $region25: #{tpu_custom_call.1} parent=5 // pred_check
      _
    $region26: #{tpu_custom_call.1} parent=5 // pred_check_branch
      %124 = sbr.rel (%p121) target = $region28
    $region27: #{tpu_custom_call.1} parent=5 // pred_region
      %s125 = ssub.s32 %s8, 1
      %p126 = scmp.lt.s32.totalorder %s13, 1
      %s127 = scalar_select %p126, %s13, 1
      %s128 = smul.addr %s127, 8
      %s129 = scalar_lea.vmem %s0, %s128
      %p130 = pneg %p34
      %p131 = pneg %p31
      %p132 = scmp.lt.s32.totalorder %s13, 1
      %s133 = scalar_select %p132, %s13, 1
      %s134 = smul.addr %s133, 8
      %s135 = scalar_lea.vmem %s1, %s134
      %p136 = pneg %p60
      %p137 = pneg %p57
      %p138 = pneg %p86
      %p139 = pneg %p83
      %p140 = scmp.lt.s32.totalorder %s13, 1
      %s141 = scalar_select %p140, %s13, 1
      %s142 = scalar_lea.vmem %s2, %s141
      %p143 = scmp.lt.s32.totalorder %s13, 1
      %s144 = scalar_select %p143, %s13, 1
      %s145 = smul.addr %s144, 8
      %s146 = scalar_lea.vmem %s0, %s145
      %p147 = scmp.lt.s32.totalorder %s13, 1
      %s148 = scalar_select %p147, %s13, 1
      %s149 = smul.addr %s148, 8
      %s150 = scalar_lea.vmem %s1, %s149
      %p151 = scmp.lt.s32.totalorder %s13, 1
      %s152 = scalar_select %p151, %s13, 1
      %s153 = scalar_lea.vmem %s2, %s152
      %v154 = vld [vmem:[%s146] sm:$0xff]
      %v155 = vld [vmem:[%s150] sm:$0xff]
      %vm156 = vcmask 64512
      %v157 = vsel %vm156, %v154, -inf
      %158 = vmax.xlane.f32.xlu0 %v157
      %v159 = vpop.xlane.xlu0 %158
      %v160 = vsub.f32 %v154, %v159
      %v161 = vmul.f32 %v160, 1.442695
      %v162 = vpow.pop %v161
      %v163 = vsel %vm156, %v162, 0.0
      %164 = vadd.xlane.f32.xlu0 %v163
      %v165 = vpop.xlane.xlu0 %164
      %v166 = vsub.f32 %v155, %v159
      %v167 = vlog2.pop %v165
      %v168 = vmul.f32 %v167, 0.6931472
      %v169 = vsub.f32 %v166, %v168
      %v170 = vmul.f32 %v169, 1.442695
      %v171 = vpow.pop %v170
      %173 = vrot.lane.b32.xlu0 %v155, 126
      %v174 = vpop.permute.xlu0 %173
      %v176 = vmul.f32 %v171, %v174
      %v177 = vsub.f32 1.0, %v176
      %179 = vrot.lane.b32.xlu0 %v169, 1
      %v180 = vpop.permute.xlu0 %179
      %v182 = vmul.f32 %v155, %v180
      %184 = vrot.lane.b32.xlu0 %v182, 127
      %v185 = vpop.permute.xlu0 %184
      %v187 = vsub.f32 %v177, %v185
      %v188 = vlaneseq
      %v189 = vshrl.u32 %v188, 7
      %s190 = smul.u32 %s13, 8
      %v191 = vstv %s190
      %v192 = vadd.s32 %v189, %v191
      %vm193 = vcmp.lt.s32.totalorder %v192, 16
      %v194 = vsel %vm193, %v187, 0.0
      %vm195 = vcmask 7168
      %v196 = vsel %vm195, %v194, 0.0
      %v197 = vrot.slane %v196, 4
      %v198 = vadd.f32 %v196, %v197
      %v199 = vrot.slane %v198, 2
      %v200 = vadd.f32 %v198, %v199
      %v201 = vrot.slane %v200, 1
      %v202 = vadd.f32 %v200, %v201
      %vm203 = vcmask 0
      %204 = vst.msk [vmem:[%s153] sm:$0x1] %vm203, %v202
      %p205 = scmp.lt.s32.totalorder %s13, 1
      %s206 = scalar_select %p205, %s13, 1
      %s207 = scalar_lea.vmem %s2, %s206
      // Predicated region
      $region29: #{tpu_custom_call.1} parent=27 // pred_check
        %p208 = pneg %p83
      $region30: #{tpu_custom_call.1} parent=27 // pred_check_branch
        %210 = sbr.rel (%p208) target = $region32
      $region31: #{tpu_custom_call.1} parent=27 // pred_region
        _
      $region32: #{tpu_custom_call.1} parent=27 // pred_fallthru
        _
    $region28: #{tpu_custom_call.1} parent=5 // pred_fallthru
      _
    %p211 = scmp.le.s32.totalorder 2, %s8
    // Predicated region
    $region33: #{tpu_custom_call.1} parent=5 // pred_check
      %p212 = pneg %p211
    $region34: #{tpu_custom_call.1} parent=5 // pred_check_branch
      %214 = sbr.rel (%p212) target = $region36
    $region35: #{tpu_custom_call.1} parent=5 // pred_region
      %s215 = ssub.s32 %s8, 2
      // Predicated region
      $region37: #{tpu_custom_call.1} parent=35 // pred_check
        %p216 = pneg %p89
      $region38: #{tpu_custom_call.1} parent=35 // pred_check_branch
        %218 = sbr.rel (%p216) target = $region40
      $region39: #{tpu_custom_call.1} parent=35 // pred_region
        %p219 = scmp.lt.s32.totalorder %s14, 1
        %s220 = scalar_select %p219, %s14, 1
        %s221 = scalar_lea.vmem %s2, %s220
      $region40: #{tpu_custom_call.1} parent=35 // pred_fallthru
        _
    $region36: #{tpu_custom_call.1} parent=5 // pred_fallthru
      _
  $region6: #{tpu_custom_call.1} parent=0 // loop_footer
    %s12 = sadd.s32 1, %s8
  $region7: #{tpu_custom_call.1} parent=0 // loop_footer_branch
    %7 = sbr.rel target = $region3
  $region8: #{tpu_custom_call.1} parent=0 // loop_exit
    _

</llo_original>
